<compile_context>
chip_gen: v6e
topology: v6e:2x2x1
jax: 0.10.0
libtpu: 0.0.40
codegen_flags: <defaults>
</compile_context>

<pallas_src>
import functools

import jax
import jax.numpy as jnp
from jax.experimental import pallas as pl
from jax.experimental.pallas import tpu as pltpu

LANES = 128  # lane width / padded feature dim


def _round_up(x, m):
    return ((x + m - 1) // m) * m


def dqn_fc_kernel(x_ref, w1_ref, b1_ref, w2_ref, b2_ref, w3_ref, b3_ref, o_ref):
    # Layer 1: raw fp32 state tile, cast to bf16 in VMEM, K=108 matmul on MXU.
    x = x_ref[...].astype(jnp.bfloat16)                       # (tm, 108)
    h1 = jnp.dot(x, w1_ref[...], preferred_element_type=jnp.float32)
    h1 = jnp.maximum(h1 + b1_ref[...], 0.0)                   # (tm, 128) fp32
    # Layer 2: 128 -> 128 (real 64 outputs zero-padded to 128 lanes).
    h2 = jnp.dot(h1.astype(jnp.bfloat16), w2_ref[...],
                 preferred_element_type=jnp.float32)
    h2 = jnp.maximum(h2 + b2_ref[...], 0.0)                   # (tm, 128) fp32
    # Layer 3: 128 -> 128 (num_actions zero-padded to 128 lanes); store bf16.
    q = jnp.dot(h2.astype(jnp.bfloat16), w3_ref[...],
                preferred_element_type=jnp.float32)
    o_ref[...] = (q + b3_ref[...]).astype(o_ref.dtype)


def prepare_params(params):
    """Pad hidden/output feature dims to 128 lanes, cast weights to bf16.

    Zero padding is exact: padded layer-2 columns give relu(0 + 0) = 0, and the
    matching zero rows of w3 contribute nothing to the final logits.
    """
    w1, b1 = params["w1"], params["b1"]           # (108, 128), (1, 128)
    w2, b2 = params["w2"], params["b2"]           # (128, 64),  (1, 64)
    w3, b3 = params["w3"], params["b3"]           # (64, na),   (1, na)
    w2 = jnp.pad(w2, ((0, 0), (0, LANES - w2.shape[1])))
    b2 = jnp.pad(b2, ((0, 0), (0, LANES - b2.shape[1])))
    w3 = jnp.pad(w3, ((0, LANES - w3.shape[0]), (0, LANES - w3.shape[1])))
    b3 = jnp.pad(b3, ((0, 0), (0, LANES - b3.shape[1])))
    return {
        "w1": w1.astype(jnp.bfloat16), "b1": b1.astype(jnp.float32),
        "w2": w2.astype(jnp.bfloat16), "b2": b2.astype(jnp.float32),
        "w3": w3.astype(jnp.bfloat16), "b3": b3.astype(jnp.float32),
    }


@functools.partial(jax.jit, static_argnames=("num_actions", "tile_m"))
def dqn_fc_forward(state, kparams, num_actions=3, tile_m=2048):
    """state: (B, state_dim) fp32 with state_dim <= 128. kparams: prepare_params output."""
    B, state_dim = state.shape
    assert state_dim <= LANES

    # Batch tile: large to amortize per-step overhead, clamped for small B, and
    # capped so the grid has >= 2 steps when possible (feeds both TCs on v7x).
    tm = min(tile_m, _round_up(B, 8))
    if B > 8 and pl.cdiv(B, tm) < 2:
        tm = _round_up(pl.cdiv(B, 2), 8)
    grid = (pl.cdiv(B, tm),)  # ragged last block handled by Pallas (masked store)

    resident = lambda shape: pl.BlockSpec(shape, lambda i: (0, 0))  # stays in VMEM
    # TODO(synk): if xprof shows exposed DMA at large B, add
    # pipeline_mode=pl.Buffered(3) on the x/out BlockSpecs.
    out = pl.pallas_call(
        dqn_fc_kernel,
        out_shape=jax.ShapeDtypeStruct((B, LANES), jnp.bfloat16),
        grid=grid,
        in_specs=[
            pl.BlockSpec((tm, state_dim), lambda i: (i, 0)),  # raw fp32 x tile (pipelined)
            resident((state_dim, 128)),                       # w1 (bf16)
            resident((1, 128)),                               # b1 (fp32)
            resident((128, LANES)),                           # w2 (padded, bf16)
            resident((1, LANES)),                             # b2 (padded, fp32)
            resident((LANES, LANES)),                         # w3 (padded, bf16)
            resident((1, LANES)),                             # b3 (padded, fp32)
        ],
        out_specs=pl.BlockSpec((tm, LANES), lambda i: (i, 0)),
        compiler_params=pltpu.CompilerParams(
            dimension_semantics=("parallel",)),               # megacore on v7x
    )(state, kparams["w1"], kparams["b1"], kparams["w2"], kparams["b2"],
      kparams["w3"], kparams["b3"])

    return out[:, :num_actions].astype(jnp.float32)


def init_params(key, state_dim=108, num_actions=3):
    """Mirror PyTorch nn.Linear default init: U(+-1/sqrt(fan_in)) for W and b.
    Weights stored as (in, out) == transpose of nn.Linear's (out, in)."""
    dims = [(state_dim, 128), (128, 64), (64, num_actions)]
    params = {}
    keys = jax.random.split(key, 2 * len(dims))
    for i, (fan_in, fan_out) in enumerate(dims):
        bound = 1.0 / float(fan_in) ** 0.5
        params[f"w{i + 1}"] = jax.random.uniform(
            keys[2 * i], (fan_in, fan_out), minval=-bound, maxval=bound,
            dtype=jnp.float32)
        params[f"b{i + 1}"] = jax.random.uniform(
            keys[2 * i + 1], (1, fan_out), minval=-bound, maxval=bound,
            dtype=jnp.float32)
    return params


def reference_forward(state, params):
    """fp32 reference applying the same bf16 quantization as the kernel's MXU inputs.

    NOTE: bf16 MXU inputs / bf16 output writeback deviate ~1e-2 relative from a
    pure-fp32 PyTorch DQN_FC; acceptable for DQN inference.
    """
    bf = lambda a: a.astype(jnp.bfloat16).astype(jnp.float32)
    hp = jax.lax.Precision.HIGHEST
    h = jnp.maximum(jnp.dot(bf(state), bf(params["w1"]), precision=hp) + params["b1"], 0.0)
    h = jnp.maximum(jnp.dot(bf(h), bf(params["w2"]), precision=hp) + params["b2"], 0.0)
    return jnp.dot(bf(h), bf(params["w3"]), precision=hp) + params["b3"]


if __name__ == "__main__":
    key = jax.random.PRNGKey(0)
    k_params, k_state = jax.random.split(key)

    state_dim, num_actions = 108, 3
    params = init_params(k_params, state_dim=state_dim, num_actions=num_actions)
    kparams = prepare_params(params)

    # Case 1: small aligned batch (single grid step).
    state = jax.random.normal(k_state, (8, state_dim), dtype=jnp.float32)
    out = jax.block_until_ready(dqn_fc_forward(state, kparams, num_actions=num_actions))
    ref = reference_forward(state, params)
    assert out.shape == (8, num_actions), out.shape
    assert jnp.allclose(out, ref, atol=2e-2, rtol=2e-2), (
        "mismatch vs. reference (B=8): max abs err "
        f"{float(jnp.max(jnp.abs(out - ref)))}")

    # Case 2: ragged batch (exercises >=2 grid steps + partial last block).
    state2 = jax.random.normal(jax.random.PRNGKey(1), (20, state_dim), dtype=jnp.float32)
    out2 = jax.block_until_ready(dqn_fc_forward(state2, kparams, num_actions=num_actions))
    ref2 = reference_forward(state2, params)
    assert out2.shape == (20, num_actions), out2.shape
    assert jnp.allclose(out2, ref2, atol=2e-2, rtol=2e-2), (
        "mismatch vs. reference (B=20): max abs err "
        f"{float(jnp.max(jnp.abs(out2 - ref2)))}")

    print("KERNEL_OK")
</pallas_src>

<mosaic_0001>
module attributes {stable_mosaic.version = 11 : i64} {
  func.func @dqn_fc_kernel(%arg0: i32, %arg1: memref<8x108xf32, #tpu.memory_space<vmem>>, %arg2: memref<108x128xbf16, #tpu.memory_space<vmem>>, %arg3: memref<1x128xf32, #tpu.memory_space<vmem>>, %arg4: memref<128x128xbf16, #tpu.memory_space<vmem>>, %arg5: memref<1x128xf32, #tpu.memory_space<vmem>>, %arg6: memref<128x128xbf16, #tpu.memory_space<vmem>>, %arg7: memref<1x128xf32, #tpu.memory_space<vmem>>, %arg8: memref<8x128xbf16, #tpu.memory_space<vmem>>) attributes {dimension_semantics = [#tpu.dimension_semantics<parallel>], iteration_bounds = array<i64: 1>, scalar_prefetch = 0 : i64, scratch_operands = 0 : i64, tpu.core_type = #tpu.core_type<tc>, window_params = [{transform_indices = @transform_0, window_bounds = array<i64: 8, 108>}, {pipeline_mode = #tpu.pipeline_mode<synchronous>, transform_indices = @transform_1, window_bounds = array<i64: 108, 128>}, {pipeline_mode = #tpu.pipeline_mode<synchronous>, transform_indices = @transform_2, window_bounds = array<i64: 1, 128>}, {pipeline_mode = #tpu.pipeline_mode<synchronous>, transform_indices = @transform_3, window_bounds = array<i64: 128, 128>}, {pipeline_mode = #tpu.pipeline_mode<synchronous>, transform_indices = @transform_4, window_bounds = array<i64: 1, 128>}, {pipeline_mode = #tpu.pipeline_mode<synchronous>, transform_indices = @transform_5, window_bounds = array<i64: 128, 128>}, {pipeline_mode = #tpu.pipeline_mode<synchronous>, transform_indices = @transform_6, window_bounds = array<i64: 1, 128>}, {transform_indices = @transform_7, window_bounds = array<i64: 8, 128>}]} {
    %c0 = arith.constant 0 : index
    %c0_0 = arith.constant 0 : index
    %0 = vector.load %arg1[%c0, %c0_0] : memref<8x108xf32, #tpu.memory_space<vmem>>, vector<8x108xf32>
    %1 = arith.truncf %0 : vector<8x108xf32> to vector<8x108xbf16>
    %c0_1 = arith.constant 0 : index
    %c0_2 = arith.constant 0 : index
    %2 = vector.load %arg2[%c0_1, %c0_2] : memref<108x128xbf16, #tpu.memory_space<vmem>>, vector<108x128xbf16>
    %cst = arith.constant dense<0.000000e+00> : vector<8x128xf32>
    %3 = tpu.matmul %1, %2, %cst {dimension_numbers = #tpu.dot_dimension_numbers<[1], [0], [0], [1], [0, 0, 1, 1], [], []>} : vector<8x108xbf16>, vector<108x128xbf16>, vector<8x128xf32> -> vector<8x128xf32>
    %c0_3 = arith.constant 0 : index
    %c0_4 = arith.constant 0 : index
    %4 = vector.load %arg3[%c0_3, %c0_4] : memref<1x128xf32, #tpu.memory_space<vmem>>, vector<1x128xf32>
    %5 = vector.broadcast %4 : vector<1x128xf32> to vector<8x128xf32>
    %6 = arith.addf %3, %5 : vector<8x128xf32>
    %cst_5 = arith.constant 0.000000e+00 : f32
    %7 = vector.broadcast %cst_5 : f32 to vector<8x128xf32>
    %8 = arith.maximumf %6, %7 : vector<8x128xf32>
    %9 = arith.truncf %8 : vector<8x128xf32> to vector<8x128xbf16>
    %c0_6 = arith.constant 0 : index
    %c0_7 = arith.constant 0 : index
    %10 = vector.load %arg4[%c0_6, %c0_7] : memref<128x128xbf16, #tpu.memory_space<vmem>>, vector<128x128xbf16>
    %cst_8 = arith.constant dense<0.000000e+00> : vector<8x128xf32>
    %11 = tpu.matmul %9, %10, %cst_8 {dimension_numbers = #tpu.dot_dimension_numbers<[1], [0], [0], [1], [0, 0, 1, 1], [], []>} : vector<8x128xbf16>, vector<128x128xbf16>, vector<8x128xf32> -> vector<8x128xf32>
    %c0_9 = arith.constant 0 : index
    %c0_10 = arith.constant 0 : index
    %12 = vector.load %arg5[%c0_9, %c0_10] : memref<1x128xf32, #tpu.memory_space<vmem>>, vector<1x128xf32>
    %13 = vector.broadcast %12 : vector<1x128xf32> to vector<8x128xf32>
    %14 = arith.addf %11, %13 : vector<8x128xf32>
    %cst_11 = arith.constant 0.000000e+00 : f32
    %15 = vector.broadcast %cst_11 : f32 to vector<8x128xf32>
    %16 = arith.maximumf %14, %15 : vector<8x128xf32>
    %17 = arith.truncf %16 : vector<8x128xf32> to vector<8x128xbf16>
    %c0_12 = arith.constant 0 : index
    %c0_13 = arith.constant 0 : index
    %18 = vector.load %arg6[%c0_12, %c0_13] : memref<128x128xbf16, #tpu.memory_space<vmem>>, vector<128x128xbf16>
    %cst_14 = arith.constant dense<0.000000e+00> : vector<8x128xf32>
    %19 = tpu.matmul %17, %18, %cst_14 {dimension_numbers = #tpu.dot_dimension_numbers<[1], [0], [0], [1], [0, 0, 1, 1], [], []>} : vector<8x128xbf16>, vector<128x128xbf16>, vector<8x128xf32> -> vector<8x128xf32>
    %c0_15 = arith.constant 0 : index
    %c0_16 = arith.constant 0 : index
    %20 = vector.load %arg7[%c0_15, %c0_16] : memref<1x128xf32, #tpu.memory_space<vmem>>, vector<1x128xf32>
    %21 = vector.broadcast %20 : vector<1x128xf32> to vector<8x128xf32>
    %22 = arith.addf %19, %21 : vector<8x128xf32>
    %23 = arith.truncf %22 : vector<8x128xf32> to vector<8x128xbf16>
    %c0_17 = arith.constant 0 : index
    %c0_18 = arith.constant 0 : index
    %24 = vector.load %arg8[%c0_17, %c0_18] : memref<8x128xbf16, #tpu.memory_space<vmem>>, vector<8x128xbf16>
    tpu.vector_store %arg8[%c0_17, %c0_18], %23 {strides = array<i32>} : memref<8x128xbf16, #tpu.memory_space<vmem>>, vector<8x128xbf16>,
    return
  }
  func.func @transform_0(%arg0: i32) -> (i32, i32) {
    %c0_i32 = arith.constant 0 : i32
    %c0_i32_0 = arith.constant 0 : i32
    return %arg0, %c0_i32 : i32, i32
  }
  func.func @transform_1(%arg0: i32) -> (i32, i32) {
    %c0_i32 = arith.constant 0 : i32
    %c0_i32_0 = arith.constant 0 : i32
    %c0_i32_1 = arith.constant 0 : i32
    return %c0_i32, %c0_i32_0 : i32, i32
  }
  func.func @transform_2(%arg0: i32) -> (i32, i32) {
    %c0_i32 = arith.constant 0 : i32
    %c0_i32_0 = arith.constant 0 : i32
    %c0_i32_1 = arith.constant 0 : i32
    return %c0_i32, %c0_i32_0 : i32, i32
  }
  func.func @transform_3(%arg0: i32) -> (i32, i32) {
    %c0_i32 = arith.constant 0 : i32
    %c0_i32_0 = arith.constant 0 : i32
    %c0_i32_1 = arith.constant 0 : i32
    return %c0_i32, %c0_i32_0 : i32, i32
  }
  func.func @transform_4(%arg0: i32) -> (i32, i32) {
    %c0_i32 = arith.constant 0 : i32
    %c0_i32_0 = arith.constant 0 : i32
    %c0_i32_1 = arith.constant 0 : i32
    return %c0_i32, %c0_i32_0 : i32, i32
  }
  func.func @transform_5(%arg0: i32) -> (i32, i32) {
    %c0_i32 = arith.constant 0 : i32
    %c0_i32_0 = arith.constant 0 : i32
    %c0_i32_1 = arith.constant 0 : i32
    return %c0_i32, %c0_i32_0 : i32, i32
  }
  func.func @transform_6(%arg0: i32) -> (i32, i32) {
    %c0_i32 = arith.constant 0 : i32
    %c0_i32_0 = arith.constant 0 : i32
    %c0_i32_1 = arith.constant 0 : i32
    return %c0_i32, %c0_i32_0 : i32, i32
  }
  func.func @transform_7(%arg0: i32) -> (i32, i32) {
    %c0_i32 = arith.constant 0 : i32
    %c0_i32_0 = arith.constant 0 : i32
    return %arg0, %c0_i32 : i32, i32
  }
}

</mosaic_0001>

<llo_original>
// kernel: dqn_fc_forward.1
$region0: #{dqn_fc_forward.1}
  #allocation0 [shape = 'u32[]', space=smem, size = 0x4, offset = 0x4, fixed_abs, tag = 'smem constant byte address 0x4 - core index']
  #allocation1 [shape = 'u32[144,128]{1,0:T(1,128)}', space=vmem, size = 0x12000, scoped, tag = 'internal scratch']
  %s0 = inlined_call_operand.hbm [shape: f32[8,108], index: 0, kind: input, shape index: {}]
  %s1 = inlined_call_operand.hbm [shape: bf16[108,128], index: 1, kind: input, shape index: {}]
  %s2 = inlined_call_operand.vmem [shape: f32[1,128], index: 2, kind: input, shape index: {}]
  %s3 = inlined_call_operand.hbm [shape: bf16[128,128], index: 3, kind: input, shape index: {}]
  %s4 = inlined_call_operand.vmem [shape: f32[1,128], index: 4, kind: input, shape index: {}]
  %s5 = inlined_call_operand.hbm [shape: bf16[128,128], index: 5, kind: input, shape index: {}]
  %s6 = inlined_call_operand.vmem [shape: f32[1,128], index: 6, kind: input, shape index: {}]
  %s7 = inlined_call_operand.vmem [shape: bf16[8,128], index: 7, kind: output, shape index: {}]
  %s8 = sld [smem:[#allocation0]]
  $region54: #{dqn_fc_forward.1} parent=0
    _
  %s10 = ssub.s32 1, %s8
  %s11 = scalar_select 0, %s10, %s8
  $region1: #{dqn_fc_forward.1} parent=0
    #allocation2 [shape = 'u8[4096]{0}', space=vmem, size = 0x1000, scoped, tag = 'input window, operand 0, single buffered']
    #allocation3 [shape = 's32[1]{0}', space=sflag, size = 0x4, scoped, tag = 'scoped memory for dqn_fc_forward.1']
    #allocation4 [shape = 'u8[28672]{0}', space=vmem, size = 0x7000, scoped, tag = 'input window, operand 1, single buffered']
    #allocation5 [shape = 's32[1]{0}', space=sflag, size = 0x4, scoped, tag = 'scoped memory for dqn_fc_forward.1']
    #allocation6 [shape = 'u8[32768]{0}', space=vmem, size = 0x8000, scoped, tag = 'input window, operand 3, single buffered']
    #allocation7 [shape = 'u8[32768]{0}', space=vmem, size = 0x8000, scoped, tag = 'input window, operand 5, single buffered']
    #allocation8 [shape = 's32[1]{0}', space=sflag, size = 0x4, scoped, tag = 'scoped memory for dqn_fc_forward.1']
    %12 = vsyncpa [#allocation3], 0
    %13 = vsyncpa [#allocation5], 0
    %14 = vsyncpa [#allocation8], 0
    // Predicated region
    $region2: #{dqn_fc_forward.1} parent=1 // pred_check
      _
    $region3: #{dqn_fc_forward.1} parent=1 // pred_check_branch
      %16 = sbr.rel (0) target = $region5
    $region4: #{dqn_fc_forward.1} parent=1 // pred_region
      %s18 = ssub.s32 128, 128
      %19 = vsyncadd [#allocation3], %s18
      %s21 = sshll.u32 [#allocation2], 4
      %s22 = int_to_ptr.vmem [resolvable:$true] %s21
      %24 = dma.hbm_to_vmem [thread:$0]  %s0, 128, %s22, [#allocation3]
    $region5: #{dqn_fc_forward.1} parent=1 // pred_fallthru
      _
    // Predicated region
    $region6: #{dqn_fc_forward.1} parent=1 // pred_check
      _
    $region7: #{dqn_fc_forward.1} parent=1 // pred_check_branch
      %26 = sbr.rel (0) target = $region9
    $region8: #{dqn_fc_forward.1} parent=1 // pred_region
      %s28 = ssub.s32 896, 896
      %29 = vsyncadd [#allocation5], %s28
      %s30 = sshll.u32 [#allocation4], 4
      %s31 = int_to_ptr.vmem [resolvable:$true] %s30
      %36 = dma.hbm_to_vmem [thread:$0]  %s1, 896, %s31, [#allocation5], 64, 64, 4
    $region9: #{dqn_fc_forward.1} parent=1 // pred_fallthru
      _
    // Predicated region
    $region10: #{dqn_fc_forward.1} parent=1 // pred_check
      _
    $region11: #{dqn_fc_forward.1} parent=1 // pred_check_branch
      %38 = sbr.rel (0) target = $region13
    $region12: #{dqn_fc_forward.1} parent=1 // pred_region
      _
    $region13: #{dqn_fc_forward.1} parent=1 // pred_fallthru
      _
    // Predicated region
    $region14: #{dqn_fc_forward.1} parent=1 // pred_check
      _
    $region15: #{dqn_fc_forward.1} parent=1 // pred_check_branch
      %40 = sbr.rel (0) target = $region17
    $region16: #{dqn_fc_forward.1} parent=1 // pred_region
      %s42 = ssub.s32 1024, 1024
      %43 = vsyncadd [#allocation5], %s42
      %s44 = sshll.u32 [#allocation6], 4
      %s45 = int_to_ptr.vmem [resolvable:$true] %s44
      %50 = dma.hbm_to_vmem [thread:$0]  %s3, 1024, %s45, [#allocation5], 64, 64, 4
    $region17: #{dqn_fc_forward.1} parent=1 // pred_fallthru
      _
    // Predicated region
    $region18: #{dqn_fc_forward.1} parent=1 // pred_check
      _
    $region19: #{dqn_fc_forward.1} parent=1 // pred_check_branch
      %52 = sbr.rel (0) target = $region21
    $region20: #{dqn_fc_forward.1} parent=1 // pred_region
      _
    $region21: #{dqn_fc_forward.1} parent=1 // pred_fallthru
      _
    // Predicated region
    $region22: #{dqn_fc_forward.1} parent=1 // pred_check
      _
    $region23: #{dqn_fc_forward.1} parent=1 // pred_check_branch
      %54 = sbr.rel (0) target = $region25
    $region24: #{dqn_fc_forward.1} parent=1 // pred_region
      %s56 = ssub.s32 1024, 1024
      %57 = vsyncadd [#allocation8], %s56
      %s58 = sshll.u32 [#allocation7], 4
      %s59 = int_to_ptr.vmem [resolvable:$true] %s58
      %64 = dma.hbm_to_vmem [thread:$0]  %s5, 1024, %s59, [#allocation8], 64, 64, 4
    $region25: #{dqn_fc_forward.1} parent=1 // pred_fallthru
      _
    // Predicated region
    $region26: #{dqn_fc_forward.1} parent=1 // pred_check
      _
    $region27: #{dqn_fc_forward.1} parent=1 // pred_check_branch
      %66 = sbr.rel (0) target = $region29
    $region28: #{dqn_fc_forward.1} parent=1 // pred_region
      _
    $region29: #{dqn_fc_forward.1} parent=1 // pred_fallthru
      _
    // Predicated region
    $region30: #{dqn_fc_forward.1} parent=1 // pred_check
      _
    $region31: #{dqn_fc_forward.1} parent=1 // pred_check_branch
      %68 = sbr.rel (0) target = $region33
    $region32: #{dqn_fc_forward.1} parent=1 // pred_region
      %69 = dma.done [#allocation3], 128
    $region33: #{dqn_fc_forward.1} parent=1 // pred_fallthru
      _
    // Predicated region
    $region34: #{dqn_fc_forward.1} parent=1 // pred_check
      _
    $region35: #{dqn_fc_forward.1} parent=1 // pred_check_branch
      %71 = sbr.rel (0) target = $region37
    $region36: #{dqn_fc_forward.1} parent=1 // pred_region
      %72 = dma.done [#allocation5], 896
    $region37: #{dqn_fc_forward.1} parent=1 // pred_fallthru
      _
    // Predicated region
    $region38: #{dqn_fc_forward.1} parent=1 // pred_check
      _
    $region39: #{dqn_fc_forward.1} parent=1 // pred_check_branch
      %74 = sbr.rel (0) target = $region41
    $region40: #{dqn_fc_forward.1} parent=1 // pred_region
      %75 = dma.done [#allocation5], 1024
    $region41: #{dqn_fc_forward.1} parent=1 // pred_fallthru
      _
    // Predicated region
    $region42: #{dqn_fc_forward.1} parent=1 // pred_check
      _
    $region43: #{dqn_fc_forward.1} parent=1 // pred_check_branch
      %77 = sbr.rel (0) target = $region45
    $region44: #{dqn_fc_forward.1} parent=1 // pred_region
      %78 = dma.done [#allocation8], 1024
    $region45: #{dqn_fc_forward.1} parent=1 // pred_fallthru
      _
    %v80 = vld [vmem:[#allocation2] sm:$0xff]
    %v81 = vpack.c.bf16 %v80, %v80
    %v82 = vld [vmem:[#allocation4] sm:$0xf]
    %v83 = vld [vmem:[#allocation4 + $0x4] sm:$0xf]
    %v84 = vld [vmem:[#allocation4 + $0x8] sm:$0xf]
    %v85 = vld [vmem:[#allocation4 + $0xc] sm:$0xf]
    %v86 = vld [vmem:[#allocation4 + $0x10] sm:$0xf]
    %v87 = vld [vmem:[#allocation4 + $0x14] sm:$0xf]
    %v88 = vld [vmem:[#allocation4 + $0x18] sm:$0xf]
    %v89 = vld [vmem:[#allocation4 + $0x1c] sm:$0xf]
    %v90 = vld [vmem:[#allocation4 + $0x20] sm:$0xf]
    %v91 = vld [vmem:[#allocation4 + $0x24] sm:$0xf]
    %v92 = vld [vmem:[#allocation4 + $0x28] sm:$0xf]
    %v93 = vld [vmem:[#allocation4 + $0x2c] sm:$0xf]
    %v94 = vld [vmem:[#allocation4 + $0x30] sm:$0xf]
    %v95 = vld [vmem:[#allocation4 + $0x34] sm:$0x3]
    %v96 = vld [vmem:[%s2] sm:$0x1]
    %v98 = vlaneseq
    %v99 = vshrl.u32 %v98, 7
    %v100 = vsub.s32 0, %v99
    %v101 = vrot.slane %v96, %v100
    %v117 = vunpack.c.l.b16 %v82
    %v118 = vunpack.c.l.b16 %v83
    %v119 = vunpack.c.l.b16 %v84
    %v120 = vunpack.c.l.b16 %v85
    %v121 = vunpack.c.l.b16 %v86
    %v122 = vunpack.c.l.b16 %v87
    %v123 = vunpack.c.l.b16 %v88
    %v124 = vunpack.c.l.b16 %v89
    %v125 = vunpack.c.l.b16 %v90
    %v126 = vunpack.c.l.b16 %v91
    %v127 = vunpack.c.l.b16 %v92
    %v128 = vunpack.c.l.b16 %v93
    %v129 = vunpack.c.l.b16 %v94
    %v130 = vunpack.c.l.b16 %v95
    %v131 = vpack.c.b16 %v118, %v117
    %v132 = vpack.c.b16 %v120, %v119
    %v133 = vpack.c.b16 %v122, %v121
    %v134 = vpack.c.b16 %v124, %v123
    %v135 = vpack.c.b16 %v126, %v125
    %v136 = vpack.c.b16 %v128, %v127
    %v137 = vpack.c.b16 %v130, %v129
    %vm144 = vcmask 883712
    %v146 = vsel %vm144, %v81, 0
    %vm148 = vcmask 1045504
    %v150 = vsel %vm148, %v137, 0
    %152 = vmatprep.subr.bf16.mxu0 0
    %153 = vmatpush1.bf16.msra.mxu0 0
    %154 = vmatprep.subr.bf16.mxu0 0
    %155 = vmatpush1.bf16.msra.mxu0 %v150
    %156 = vmatprep.subr.bf16.mxu0 0
    %157 = vmatpush1.bf16.msra.mxu0 %v136
    %158 = vmatprep.subr.bf16.mxu0 0
    %159 = vmatpush1.bf16.msra.mxu0 %v135
    %160 = vmatprep.subr.bf16.mxu0 0
    %161 = vmatpush1.bf16.msra.mxu0 %v134
    %162 = vmatprep.subr.bf16.mxu0 0
    %163 = vmatpush1.bf16.msra.mxu0 %v133
    %164 = vmatprep.subr.bf16.mxu0 0
    %165 = vmatpush1.bf16.msra.mxu0 %v132
    %166 = vmatprep.subr.bf16.mxu0 0
    %167 = vmatpush1.bf16.msra.mxu0 %v131
    %168 = vmatprep.subr.bf16.mxu0 0
    %169 = vmatpush2.bf16.msra.mxu0 0
    %170 = vmatprep.subr.bf16.mxu0 0
    %171 = vmatpush2.bf16.msra.mxu0 0
    %172 = vmatprep.subr.bf16.mxu0 0
    %173 = vmatpush2.bf16.msra.mxu0 0
    %174 = vmatprep.subr.bf16.mxu0 0
    %175 = vmatpush2.bf16.msra.mxu0 0
    %176 = vmatprep.subr.bf16.mxu0 0
    %177 = vmatpush2.bf16.msra.mxu0 0
    %178 = vmatprep.subr.bf16.mxu0 0
    %179 = vmatpush2.bf16.msra.mxu0 0
    %180 = vmatprep.subr.bf16.mxu0 0
    %181 = vmatpush2.bf16.msra.mxu0 0
    %182 = vmatprep.subr.bf16.mxu0 0
    %183 = vmatpush2.bf16.msra.mxu0 0
    %184 = vmatprep.mubr.bf16.mxu0 0
    %185 = vmatmul.mubr.bf16.gmra.mxu0 %v146
    %v186 = vpop.f32.mrf.mxu0
    %v187 = vadd.f32 %v101, %v186
    %v188 = vpop.f32.mrf.mxu0
    %v189 = vpop.f32.mrf.mxu0
    %v190 = vpop.f32.mrf.mxu0
    %191 = vdwg.mxu0
    %v192 = vmax.f32 %v187, 0.0
    %v193 = vpack.c.bf16 %v192, %v192
    %v194 = vld [vmem:[#allocation6] sm:$0xf]
    %v195 = vld [vmem:[#allocation6 + $0x4] sm:$0xf]
    %v196 = vld [vmem:[#allocation6 + $0x8] sm:$0xf]
    %v197 = vld [vmem:[#allocation6 + $0xc] sm:$0xf]
    %v198 = vld [vmem:[#allocation6 + $0x10] sm:$0xf]
    %v199 = vld [vmem:[#allocation6 + $0x14] sm:$0xf]
    %v200 = vld [vmem:[#allocation6 + $0x18] sm:$0xf]
    %v201 = vld [vmem:[#allocation6 + $0x1c] sm:$0xf]
    %v202 = vld [vmem:[#allocation6 + $0x20] sm:$0xf]
    %v203 = vld [vmem:[#allocation6 + $0x24] sm:$0xf]
    %v204 = vld [vmem:[#allocation6 + $0x28] sm:$0xf]
    %v205 = vld [vmem:[#allocation6 + $0x2c] sm:$0xf]
    %v206 = vld [vmem:[#allocation6 + $0x30] sm:$0xf]
    %v207 = vld [vmem:[#allocation6 + $0x34] sm:$0xf]
    %v208 = vld [vmem:[#allocation6 + $0x38] sm:$0xf]
    %v209 = vld [vmem:[#allocation6 + $0x3c] sm:$0xf]
    %v210 = vld [vmem:[%s4] sm:$0x1]
    %v212 = vlaneseq
    %v213 = vshrl.u32 %v212, 7
    %v214 = vsub.s32 0, %v213
    %v215 = vrot.slane %v210, %v214
    %v233 = vunpack.c.l.b16 %v194
    %v234 = vunpack.c.l.b16 %v195
    %v235 = vunpack.c.l.b16 %v196
    %v236 = vunpack.c.l.b16 %v197
    %v237 = vunpack.c.l.b16 %v198
    %v238 = vunpack.c.l.b16 %v199
    %v239 = vunpack.c.l.b16 %v200
    %v240 = vunpack.c.l.b16 %v201
    %v241 = vunpack.c.l.b16 %v202
    %v242 = vunpack.c.l.b16 %v203
    %v243 = vunpack.c.l.b16 %v204
    %v244 = vunpack.c.l.b16 %v205
    %v245 = vunpack.c.l.b16 %v206
    %v246 = vunpack.c.l.b16 %v207
    %v247 = vunpack.c.l.b16 %v208
    %v248 = vunpack.c.l.b16 %v209
    %v249 = vpack.c.b16 %v234, %v233
    %v250 = vpack.c.b16 %v236, %v235
    %v251 = vpack.c.b16 %v238, %v237
    %v252 = vpack.c.b16 %v240, %v239
    %v253 = vpack.c.b16 %v242, %v241
    %v254 = vpack.c.b16 %v244, %v243
    %v255 = vpack.c.b16 %v246, %v245
    %v256 = vpack.c.b16 %v248, %v247
    %265 = vmatprep.subr.bf16.mxu0 0
    %266 = vmatpush1.bf16.msra.mxu0 %v256
    %267 = vmatprep.subr.bf16.mxu0 0
    %268 = vmatpush1.bf16.msra.mxu0 %v255
    %269 = vmatprep.subr.bf16.mxu0 0
    %270 = vmatpush1.bf16.msra.mxu0 %v254
    %271 = vmatprep.subr.bf16.mxu0 0
    %272 = vmatpush1.bf16.msra.mxu0 %v253
    %273 = vmatprep.subr.bf16.mxu0 0
    %274 = vmatpush1.bf16.msra.mxu0 %v252
    %275 = vmatprep.subr.bf16.mxu0 0
    %276 = vmatpush1.bf16.msra.mxu0 %v251
    %277 = vmatprep.subr.bf16.mxu0 0
    %278 = vmatpush1.bf16.msra.mxu0 %v250
    %279 = vmatprep.subr.bf16.mxu0 0
    %280 = vmatpush1.bf16.msra.mxu0 %v249
    %281 = vmatprep.subr.bf16.mxu0 0
    %282 = vmatpush2.bf16.msra.mxu0 0
    %283 = vmatprep.subr.bf16.mxu0 0
    %284 = vmatpush2.bf16.msra.mxu0 0
    %285 = vmatprep.subr.bf16.mxu0 0
    %286 = vmatpush2.bf16.msra.mxu0 0
    %287 = vmatprep.subr.bf16.mxu0 0
    %288 = vmatpush2.bf16.msra.mxu0 0
    %289 = vmatprep.subr.bf16.mxu0 0
    %290 = vmatpush2.bf16.msra.mxu0 0
    %291 = vmatprep.subr.bf16.mxu0 0
    %292 = vmatpush2.bf16.msra.mxu0 0
    %293 = vmatprep.subr.bf16.mxu0 0
    %294 = vmatpush2.bf16.msra.mxu0 0
    %295 = vmatprep.subr.bf16.mxu0 0
    %296 = vmatpush2.bf16.msra.mxu0 0
    %297 = vmatprep.mubr.bf16.mxu0 0
    %298 = vmatmul.mubr.bf16.gmra.mxu0 %v193
    %v299 = vpop.f32.mrf.mxu0
    %v300 = vadd.f32 %v215, %v299
    %v301 = vpop.f32.mrf.mxu0
    %v302 = vpop.f32.mrf.mxu0
    %v303 = vpop.f32.mrf.mxu0
    %304 = vdwg.mxu0
    %v305 = vmax.f32 %v300, 0.0
    %v306 = vpack.c.bf16 %v305, %v305
    %v307 = vld [vmem:[#allocation7] sm:$0xf]
    %v308 = vld [vmem:[#allocation7 + $0x4] sm:$0xf]
    %v309 = vld [vmem:[#allocation7 + $0x8] sm:$0xf]
    %v310 = vld [vmem:[#allocation7 + $0xc] sm:$0xf]
    %v311 = vld [vmem:[#allocation7 + $0x10] sm:$0xf]
    %v312 = vld [vmem:[#allocation7 + $0x14] sm:$0xf]
    %v313 = vld [vmem:[#allocation7 + $0x18] sm:$0xf]
    %v314 = vld [vmem:[#allocation7 + $0x1c] sm:$0xf]
    %v315 = vld [vmem:[#allocation7 + $0x20] sm:$0xf]
    %v316 = vld [vmem:[#allocation7 + $0x24] sm:$0xf]
    %v317 = vld [vmem:[#allocation7 + $0x28] sm:$0xf]
    %v318 = vld [vmem:[#allocation7 + $0x2c] sm:$0xf]
    %v319 = vld [vmem:[#allocation7 + $0x30] sm:$0xf]
    %v320 = vld [vmem:[#allocation7 + $0x34] sm:$0xf]
    %v321 = vld [vmem:[#allocation7 + $0x38] sm:$0xf]
    %v322 = vld [vmem:[#allocation7 + $0x3c] sm:$0xf]
    %v323 = vld [vmem:[%s6] sm:$0x1]
    %v325 = vlaneseq
    %v326 = vshrl.u32 %v325, 7
    %v327 = vsub.s32 0, %v326
    %v328 = vrot.slane %v323, %v327
    %v346 = vunpack.c.l.b16 %v307
    %v347 = vunpack.c.l.b16 %v308
    %v348 = vunpack.c.l.b16 %v309
    %v349 = vunpack.c.l.b16 %v310
    %v350 = vunpack.c.l.b16 %v311
    %v351 = vunpack.c.l.b16 %v312
    %v352 = vunpack.c.l.b16 %v313
    %v353 = vunpack.c.l.b16 %v314
    %v354 = vunpack.c.l.b16 %v315
    %v355 = vunpack.c.l.b16 %v316
    %v356 = vunpack.c.l.b16 %v317
    %v357 = vunpack.c.l.b16 %v318
    %v358 = vunpack.c.l.b16 %v319
    %v359 = vunpack.c.l.b16 %v320
    %v360 = vunpack.c.l.b16 %v321
    %v361 = vunpack.c.l.b16 %v322
    %v362 = vpack.c.b16 %v347, %v346
    %v363 = vpack.c.b16 %v349, %v348
    %v364 = vpack.c.b16 %v351, %v350
    %v365 = vpack.c.b16 %v353, %v352
    %v366 = vpack.c.b16 %v355, %v354
    %v367 = vpack.c.b16 %v357, %v356
    %v368 = vpack.c.b16 %v359, %v358
    %v369 = vpack.c.b16 %v361, %v360
    %378 = vmatprep.subr.bf16.mxu0 0
    %379 = vmatpush1.bf16.msra.mxu0 %v369
    %380 = vmatprep.subr.bf16.mxu0 0
    %381 = vmatpush1.bf16.msra.mxu0 %v368
    %382 = vmatprep.subr.bf16.mxu0 0
    %383 = vmatpush1.bf16.msra.mxu0 %v367
    %384 = vmatprep.subr.bf16.mxu0 0
    %385 = vmatpush1.bf16.msra.mxu0 %v366
    %386 = vmatprep.subr.bf16.mxu0 0
    %387 = vmatpush1.bf16.msra.mxu0 %v365
    %388 = vmatprep.subr.bf16.mxu0 0
    %389 = vmatpush1.bf16.msra.mxu0 %v364
    %390 = vmatprep.subr.bf16.mxu0 0
    %391 = vmatpush1.bf16.msra.mxu0 %v363
    %392 = vmatprep.subr.bf16.mxu0 0
    %393 = vmatpush1.bf16.msra.mxu0 %v362
    %394 = vmatprep.subr.bf16.mxu0 0
    %395 = vmatpush2.bf16.msra.mxu0 0
    %396 = vmatprep.subr.bf16.mxu0 0
    %397 = vmatpush2.bf16.msra.mxu0 0
    %398 = vmatprep.subr.bf16.mxu0 0
    %399 = vmatpush2.bf16.msra.mxu0 0
    %400 = vmatprep.subr.bf16.mxu0 0
    %401 = vmatpush2.bf16.msra.mxu0 0
    %402 = vmatprep.subr.bf16.mxu0 0
    %403 = vmatpush2.bf16.msra.mxu0 0
    %404 = vmatprep.subr.bf16.mxu0 0
    %405 = vmatpush2.bf16.msra.mxu0 0
    %406 = vmatprep.subr.bf16.mxu0 0
    %407 = vmatpush2.bf16.msra.mxu0 0
    %408 = vmatprep.subr.bf16.mxu0 0
    %409 = vmatpush2.bf16.msra.mxu0 0
    %410 = vmatprep.mubr.bf16.mxu0 0
    %411 = vmatmul.mubr.bf16.gmra.mxu0 %v306
    %v412 = vpop.f32.mrf.mxu0
    %v413 = vadd.f32 %v328, %v412
    %v414 = vpop.f32.mrf.mxu0
    %v415 = vpop.f32.mrf.mxu0
    %v416 = vpop.f32.mrf.mxu0
    %417 = vdwg.mxu0
    %v418 = vpack.c.bf16 %v413, %v413
    %419 = vst [vmem:[%s7] sm:$0xf] %v418
    // Predicated region
    $region46: #{dqn_fc_forward.1} parent=1 // pred_check
      _
    $region47: #{dqn_fc_forward.1} parent=1 // pred_check_branch
      %421 = sbr.rel (0) target = $region49
    $region48: #{dqn_fc_forward.1} parent=1 // pred_region
      _
    $region49: #{dqn_fc_forward.1} parent=1 // pred_fallthru
      _
    // Predicated region
    $region50: #{dqn_fc_forward.1} parent=1 // pred_check
      _
    $region51: #{dqn_fc_forward.1} parent=1 // pred_check_branch
      %423 = sbr.rel (0) target = $region53
    $region52: #{dqn_fc_forward.1} parent=1 // pred_region
      _
    $region53: #{dqn_fc_forward.1} parent=1 // pred_fallthru
      _
    %424 = vsyncpa [#allocation3], 1
    %425 = vsyncpa [#allocation5], 1
    %426 = vsyncpa [#allocation8], 1

</llo_original>
